<compile_context>
chip_gen: v7x
topology: tpu7x:2x2x1
jax: 0.10.0
libtpu: 0.0.40
codegen_flags: <defaults>
</compile_context>

<pallas_src>
import functools

import jax
import jax.numpy as jnp
from jax.experimental import pallas as pl
from jax.experimental.pallas import tpu as pltpu


def _round_up(x: int, m: int) -> int:
    return (x + m - 1) // m * m


# ----------------------------------------------------------------------------
# Fused kernel: the entire encoder+decoder stack for one batch tile.
#   x_ref : (TILE_M, d_in)    input tile, no lane padding (d_in == full dim)
#   w_ref : (L, D, D)         stacked, zero-padded weights (compute dtype)
#   b_ref : (L, D)            stacked, zero-padded biases (f32)
#   o_ref : (TILE_M, d_out)   output tile, only the useful lanes
# ----------------------------------------------------------------------------
def _fused_mlp_kernel(x_ref, w_ref, b_ref, o_ref, *, d_in, relu_flags,
                      compute_dtype):
    h = x_ref[...]                          # (TILE_M, d_in)
    b_all = b_ref[...]                      # (L, D) f32, loaded once
    for l, relu in enumerate(relu_flags):
        w = w_ref[l]                        # (D, D) compute dtype
        if l == 0:
            w = w[:d_in, :]                 # layer 0 contracts over d_in only
        y = jnp.dot(h.astype(compute_dtype), w,
                    preferred_element_type=jnp.float32)
        y = y + b_all[l:l + 1, :]           # f32 bias add on f32 accumulator
        if relu:
            y = jnp.maximum(y, 0.0)
        h = y                               # zero-padded lanes stay exactly 0
    o_ref[...] = h[:, :o_ref.shape[1]].astype(o_ref.dtype)


# ----------------------------------------------------------------------------
# RegModel: all layers fused into a single pallas_call.
# ----------------------------------------------------------------------------
class RegModelPallas:
    def __init__(self, encoder_layers, decoder_layers, *,
                 compute_dtype=jnp.bfloat16):
        # Each layer: (W [in, out], b [out], apply_relu: bool) — equivalent to
        # torch Linear with weight of shape [out, in] (we store W transposed).
        layers = list(encoder_layers) + list(decoder_layers)
        assert len(layers) > 0
        dims = []
        for (w, b, _) in layers:
            dims += [int(w.shape[0]), int(w.shape[1])]
        self.d_in = int(layers[0][0].shape[0])
        self.d_out = int(layers[-1][0].shape[1])
        # Exactly one MXU tile wide; padding further only wastes FLOPs.
        self.d_pad = _round_up(max(dims), 128)
        self.relu_flags = tuple(bool(r) for (_, _, r) in layers)
        self.compute_dtype = compute_dtype

        D = self.d_pad
        w_stack, b_stack = [], []
        for (w, b, _) in layers:
            wp = jnp.zeros((D, D), compute_dtype)
            wp = wp.at[: w.shape[0], : w.shape[1]].set(w.astype(compute_dtype))
            bp = jnp.zeros((D,), jnp.float32)
            bp = bp.at[: b.shape[0]].set(b.astype(jnp.float32))
            w_stack.append(wp)
            b_stack.append(bp)
        self.w_stack = jnp.stack(w_stack)   # (L, D, D)
        self.b_stack = jnp.stack(b_stack)   # (L, D)

    def __call__(self, X):
        M, K = X.shape
        assert K == self.d_in
        D = self.d_pad
        L = int(self.w_stack.shape[0])
        out_dtype = X.dtype

        # bf16 MXU inputs also halve the X DMA; f32 path keeps X untouched.
        if jnp.dtype(self.compute_dtype).itemsize < jnp.dtype(X.dtype).itemsize:
            in_dtype = jnp.dtype(self.compute_dtype)
        else:
            in_dtype = jnp.dtype(X.dtype)
        sublane = 16 if in_dtype.itemsize == 2 else 8

        # Batch tiling: large balanced tiles (cap 2048 rows) near the HBM
        # roofline; >= 2 grid steps when there is enough work so both v7x
        # TensorCores get a share of the "parallel" batch axis.
        tile_cap = 2048
        n_tiles = pl.cdiv(M, tile_cap)
        if M >= 4 * sublane:
            n_tiles = max(n_tiles, 2)
        tile_m = _round_up(pl.cdiv(M, n_tiles), sublane)
        m_pad = _round_up(M, tile_m)
        grid_m = m_pad // tile_m

        # Only row padding (and optional bf16 cast) — the lane dim stays d_in,
        # so no 4x-inflated copy of X is ever written to HBM.
        if m_pad != M or in_dtype != X.dtype:
            x_in = jnp.pad(X, ((0, m_pad - M), (0, 0))).astype(in_dtype)
        else:
            x_in = X

        flops = 2 * m_pad * (self.d_in * D + (L - 1) * D * D)
        bytes_accessed = (x_in.size * x_in.dtype.itemsize
                          + self.w_stack.size * self.w_stack.dtype.itemsize
                          + self.b_stack.size * self.b_stack.dtype.itemsize
                          + m_pad * self.d_out * jnp.dtype(out_dtype).itemsize)

        out = pl.pallas_call(
            functools.partial(
                _fused_mlp_kernel,
                d_in=self.d_in,
                relu_flags=self.relu_flags,
                compute_dtype=self.compute_dtype,
            ),
            out_shape=jax.ShapeDtypeStruct((m_pad, self.d_out), out_dtype),
            grid=(grid_m,),
            in_specs=[
                # X: tiled over the batch axis (pipelined, megacore-parallel).
                # Last dim == full array dim (d_in), so no 128-lane padding.
                pl.BlockSpec((tile_m, self.d_in), lambda i: (i, 0)),
                # Weights / biases: constant index_map -> VMEM-resident.
                pl.BlockSpec((L, D, D), lambda i: (0, 0, 0)),
                pl.BlockSpec((L, D), lambda i: (0, 0)),
            ],
            # d_out-wide output block: 4x less writeback than a 128-lane slab
            # and no lane-slice copy in the wrapper afterwards.
            out_specs=pl.BlockSpec((tile_m, self.d_out), lambda i: (i, 0)),
            compiler_params=pltpu.CompilerParams(
                dimension_semantics=("parallel",),
            ),
            cost_estimate=pl.CostEstimate(
                flops=flops, transcendentals=0,
                bytes_accessed=bytes_accessed),
        )(x_in, self.w_stack, self.b_stack)

        return out[:M] if m_pad != M else out


def _init_linear(key, fan_in, fan_out, dtype=jnp.float32):
    """Deterministic Kaiming-uniform-ish init (matches nn.Linear bounds)."""
    kw, kb = jax.random.split(key)
    bound = 1.0 / (fan_in ** 0.5)
    w = jax.random.uniform(kw, (fan_in, fan_out), dtype, -bound, bound)
    b = jax.random.uniform(kb, (fan_out,), dtype, -bound, bound)
    return w, b


def _reference(X, layers):
    """Plain-JAX reference (same math as the torch forward)."""
    h = X
    for (w, b, relu) in layers:
        h = h @ w + b
        if relu:
            h = jnp.maximum(h, 0.0)
    return h


if __name__ == "__main__":
    key = jax.random.PRNGKey(0)
    k_in, k_in2, k_e1, k_e2, k_d1, k_d2 = jax.random.split(key, 6)

    batch, d_in, d_hidden, d_latent = 8, 32, 64, 16

    we1, be1 = _init_linear(k_e1, d_in, d_hidden)
    we2, be2 = _init_linear(k_e2, d_hidden, d_latent)
    wd1, bd1 = _init_linear(k_d1, d_latent, d_hidden)
    wd2, bd2 = _init_linear(k_d2, d_hidden, d_in)

    encoder_layers = [(we1, be1, True), (we2, be2, True)]
    decoder_layers = [(wd1, bd1, True), (wd2, bd2, False)]
    all_layers = encoder_layers + decoder_layers

    X = jax.random.normal(k_in, (batch, d_in), jnp.float32)
    ref = _reference(X, all_layers)

    # f32 MXU-input path: exact semantics.
    model_f32 = RegModelPallas(encoder_layers, decoder_layers,
                               compute_dtype=jnp.float32)
    out_f32 = jax.block_until_ready(model_f32(X))
    assert out_f32.shape == (batch, d_in)
    assert jnp.allclose(out_f32, ref, atol=1e-5, rtol=1e-5)

    # Default bf16 MXU-input path (v6e/v7x throughput lever), f32 accumulate.
    model = RegModelPallas(encoder_layers, decoder_layers)
    out_bf16 = jax.block_until_ready(model(X))
    assert out_bf16.shape == (batch, d_in)
    assert jnp.allclose(out_bf16, ref, atol=1e-1, rtol=1e-1)

    # Multi-tile path: row padding + balanced 2-step parallel grid.
    X_big = jax.random.normal(k_in2, (200, d_in), jnp.float32)
    ref_big = _reference(X_big, all_layers)
    out_big = jax.block_until_ready(model(X_big))
    assert out_big.shape == (200, d_in)
    assert jnp.allclose(out_big, ref_big, atol=1e-1, rtol=1e-1)

    # TODO(synk): RegModel.load/save (torch state_dict I/O) are host-side and
    # have no kernel equivalent; parameters are passed in directly instead.

    print("KERNEL_OK")
</pallas_src>

<mosaic_0001>
module attributes {stable_mosaic.version = 11 : i64} {
  func.func @_fused_mlp_kernel(%arg0: i32, %arg1: memref<8x32xf32, #tpu.memory_space<vmem>>, %arg2: memref<4x128x128xf32, #tpu.memory_space<vmem>>, %arg3: memref<4x128xf32, #tpu.memory_space<vmem>>, %arg4: memref<8x32xf32, #tpu.memory_space<vmem>>) attributes {dimension_semantics = [#tpu.dimension_semantics<parallel>], iteration_bounds = array<i64: 1>, scalar_prefetch = 0 : i64, scratch_operands = 0 : i64, tpu.core_type = #tpu.core_type<tc>, window_params = [{transform_indices = @transform_0, window_bounds = array<i64: 8, 32>}, {pipeline_mode = #tpu.pipeline_mode<synchronous>, transform_indices = @transform_1, window_bounds = array<i64: 4, 128, 128>}, {pipeline_mode = #tpu.pipeline_mode<synchronous>, transform_indices = @transform_2, window_bounds = array<i64: 4, 128>}, {transform_indices = @transform_3, window_bounds = array<i64: 8, 32>}]} {
    %c0 = arith.constant 0 : index
    %c0_0 = arith.constant 0 : index
    %0 = vector.load %arg1[%c0, %c0_0] : memref<8x32xf32, #tpu.memory_space<vmem>>, vector<8x32xf32>
    %c0_1 = arith.constant 0 : index
    %c0_2 = arith.constant 0 : index
    %1 = vector.load %arg3[%c0_1, %c0_2] : memref<4x128xf32, #tpu.memory_space<vmem>>, vector<4x128xf32>
    %c0_3 = arith.constant 0 : index
    %c0_4 = arith.constant 0 : index
    %c0_5 = arith.constant 0 : index
    %2 = vector.load %arg2[%c0_3, %c0_4, %c0_5] : memref<4x128x128xf32, #tpu.memory_space<vmem>>, vector<1x128x128xf32>
    %3 = vector.shape_cast %2 : vector<1x128x128xf32> to vector<128x128xf32>
    %4 = vector.extract_strided_slice %3 {offsets = [0, 0], sizes = [32, 128], strides = [1, 1]} : vector<128x128xf32> to vector<32x128xf32>
    %cst = arith.constant dense<0.000000e+00> : vector<8x128xf32>
    %5 = tpu.matmul %0, %4, %cst {dimension_numbers = #tpu.dot_dimension_numbers<[1], [0], [0], [1], [0, 0, 1, 1], [], []>} : vector<8x32xf32>, vector<32x128xf32>, vector<8x128xf32> -> vector<8x128xf32>
    %6 = vector.extract_strided_slice %1 {offsets = [0, 0], sizes = [1, 128], strides = [1, 1]} : vector<4x128xf32> to vector<1x128xf32>
    %7 = vector.broadcast %6 : vector<1x128xf32> to vector<8x128xf32>
    %8 = arith.addf %5, %7 : vector<8x128xf32>
    %cst_6 = arith.constant 0.000000e+00 : f32
    %9 = vector.broadcast %cst_6 : f32 to vector<8x128xf32>
    %10 = arith.maximumf %8, %9 : vector<8x128xf32>
    %c1 = arith.constant 1 : index
    %c0_7 = arith.constant 0 : index
    %c0_8 = arith.constant 0 : index
    %11 = vector.load %arg2[%c1, %c0_7, %c0_8] : memref<4x128x128xf32, #tpu.memory_space<vmem>>, vector<1x128x128xf32>
    %12 = vector.shape_cast %11 : vector<1x128x128xf32> to vector<128x128xf32>
    %cst_9 = arith.constant dense<0.000000e+00> : vector<8x128xf32>
    %13 = tpu.matmul %10, %12, %cst_9 {dimension_numbers = #tpu.dot_dimension_numbers<[1], [0], [0], [1], [0, 0, 1, 1], [], []>} : vector<8x128xf32>, vector<128x128xf32>, vector<8x128xf32> -> vector<8x128xf32>
    %14 = vector.extract_strided_slice %1 {offsets = [1, 0], sizes = [1, 128], strides = [1, 1]} : vector<4x128xf32> to vector<1x128xf32>
    %15 = vector.broadcast %14 : vector<1x128xf32> to vector<8x128xf32>
    %16 = arith.addf %13, %15 : vector<8x128xf32>
    %cst_10 = arith.constant 0.000000e+00 : f32
    %17 = vector.broadcast %cst_10 : f32 to vector<8x128xf32>
    %18 = arith.maximumf %16, %17 : vector<8x128xf32>
    %c2 = arith.constant 2 : index
    %c0_11 = arith.constant 0 : index
    %c0_12 = arith.constant 0 : index
    %19 = vector.load %arg2[%c2, %c0_11, %c0_12] : memref<4x128x128xf32, #tpu.memory_space<vmem>>, vector<1x128x128xf32>
    %20 = vector.shape_cast %19 : vector<1x128x128xf32> to vector<128x128xf32>
    %cst_13 = arith.constant dense<0.000000e+00> : vector<8x128xf32>
    %21 = tpu.matmul %18, %20, %cst_13 {dimension_numbers = #tpu.dot_dimension_numbers<[1], [0], [0], [1], [0, 0, 1, 1], [], []>} : vector<8x128xf32>, vector<128x128xf32>, vector<8x128xf32> -> vector<8x128xf32>
    %22 = vector.extract_strided_slice %1 {offsets = [2, 0], sizes = [1, 128], strides = [1, 1]} : vector<4x128xf32> to vector<1x128xf32>
    %23 = vector.broadcast %22 : vector<1x128xf32> to vector<8x128xf32>
    %24 = arith.addf %21, %23 : vector<8x128xf32>
    %cst_14 = arith.constant 0.000000e+00 : f32
    %25 = vector.broadcast %cst_14 : f32 to vector<8x128xf32>
    %26 = arith.maximumf %24, %25 : vector<8x128xf32>
    %c3 = arith.constant 3 : index
    %c0_15 = arith.constant 0 : index
    %c0_16 = arith.constant 0 : index
    %27 = vector.load %arg2[%c3, %c0_15, %c0_16] : memref<4x128x128xf32, #tpu.memory_space<vmem>>, vector<1x128x128xf32>
    %28 = vector.shape_cast %27 : vector<1x128x128xf32> to vector<128x128xf32>
    %cst_17 = arith.constant dense<0.000000e+00> : vector<8x128xf32>
    %29 = tpu.matmul %26, %28, %cst_17 {dimension_numbers = #tpu.dot_dimension_numbers<[1], [0], [0], [1], [0, 0, 1, 1], [], []>} : vector<8x128xf32>, vector<128x128xf32>, vector<8x128xf32> -> vector<8x128xf32>
    %30 = vector.extract_strided_slice %1 {offsets = [3, 0], sizes = [1, 128], strides = [1, 1]} : vector<4x128xf32> to vector<1x128xf32>
    %31 = vector.broadcast %30 : vector<1x128xf32> to vector<8x128xf32>
    %32 = arith.addf %29, %31 : vector<8x128xf32>
    %33 = vector.extract_strided_slice %32 {offsets = [0, 0], sizes = [8, 32], strides = [1, 1]} : vector<8x128xf32> to vector<8x32xf32>
    %c0_18 = arith.constant 0 : index
    %c0_19 = arith.constant 0 : index
    %34 = vector.load %arg4[%c0_18, %c0_19] : memref<8x32xf32, #tpu.memory_space<vmem>>, vector<8x32xf32>
    tpu.vector_store %arg4[%c0_18, %c0_19], %33 {strides = array<i32>} : memref<8x32xf32, #tpu.memory_space<vmem>>, vector<8x32xf32>,
    return
  }
  func.func @transform_0(%arg0: i32) -> (i32, i32) {
    %c0_i32 = arith.constant 0 : i32
    %c0_i32_0 = arith.constant 0 : i32
    return %arg0, %c0_i32 : i32, i32
  }
  func.func @transform_1(%arg0: i32) -> (i32, i32, i32) {
    %c0_i32 = arith.constant 0 : i32
    %c0_i32_0 = arith.constant 0 : i32
    %c0_i32_1 = arith.constant 0 : i32
    %c0_i32_2 = arith.constant 0 : i32
    return %c0_i32, %c0_i32_0, %c0_i32_1 : i32, i32, i32
  }
  func.func @transform_2(%arg0: i32) -> (i32, i32) {
    %c0_i32 = arith.constant 0 : i32
    %c0_i32_0 = arith.constant 0 : i32
    %c0_i32_1 = arith.constant 0 : i32
    return %c0_i32, %c0_i32_0 : i32, i32
  }
  func.func @transform_3(%arg0: i32) -> (i32, i32) {
    %c0_i32 = arith.constant 0 : i32
    %c0_i32_0 = arith.constant 0 : i32
    return %arg0, %c0_i32 : i32, i32
  }
}

</mosaic_0001>

<llo_original>
// kernel: tpu_custom_call.1
$region0: #{tpu_custom_call.1}
  #allocation0 [shape = 'u32[]', space=smem, size = 0x4, offset = 0x4, fixed_abs, tag = 'smem constant byte address 0x4 - core index']
  #allocation1 [shape = 'u32[144,128]{1,0:T(1,128)}', space=vmem, size = 0x12000, scoped, tag = 'internal scratch']
  %s0 = inlined_call_operand.hbm [shape: f32[8,32], index: 0, kind: input, shape index: {}]
  %s1 = inlined_call_operand.hbm [shape: f32[4,128,128], index: 1, kind: input, shape index: {}]
  %s2 = inlined_call_operand.vmem [shape: f32[4,128], index: 2, kind: input, shape index: {}]
  %s3 = inlined_call_operand.hbm [shape: f32[8,32], index: 3, kind: output, shape index: {}]
  %s4 = sld [smem:[#allocation0]]
  $region30: #{tpu_custom_call.1} parent=0
    _
  %s6 = ssub.s32 1, %s4
  %s7 = scalar_select 0, %s6, %s4
  $region1: #{tpu_custom_call.1} parent=0
    #allocation2 [shape = 'u8[4096]{0}', space=vmem, size = 0x1000, scoped, tag = 'input window, operand 0, single buffered']
    #allocation3 [shape = 's32[1]{0}', space=sflag, size = 0x4, scoped, tag = 'scoped memory for tpu_custom_call.1']
    #allocation4 [shape = 's32[1]{0}', space=sflag, size = 0x4, scoped, tag = 'scoped memory for tpu_custom_call.1']
    #allocation5 [shape = 'u8[262144]{0}', space=vmem, size = 0x40000, scoped, tag = 'input window, operand 1, single buffered']
    #allocation6 [shape = 's32[1]{0}', space=sflag, size = 0x4, scoped, tag = 'scoped memory for tpu_custom_call.1']
    #allocation7 [shape = 'u8[4096]{0}', space=vmem, size = 0x1000, scoped, tag = 'output window, operand 0, single buffered']
    %8 = vsyncpa [#allocation3], 0
    %9 = vsyncpa [#allocation6], 0
    %10 = vsyncpa [#allocation4], 0
    // Predicated region
    $region2: #{tpu_custom_call.1} parent=1 // pred_check
      _
    $region3: #{tpu_custom_call.1} parent=1 // pred_check_branch
      %12 = sbr.rel (0) target = $region5
    $region4: #{tpu_custom_call.1} parent=1 // pred_region
      %s14 = ssub.s32 128, 128
      %15 = vsyncadd [#allocation3], %s14
      %s17 = sshll.u32 [#allocation2], 4
      %s18 = int_to_ptr.vmem [resolvable:$true] %s17
      %20 = dma.hbm_to_vmem [thread:$0]  %s0, 128, %s18, [#allocation3]
    $region5: #{tpu_custom_call.1} parent=1 // pred_fallthru
      _
    // Predicated region
    $region6: #{tpu_custom_call.1} parent=1 // pred_check
      _
    $region7: #{tpu_custom_call.1} parent=1 // pred_check_branch
      %22 = sbr.rel (0) target = $region9
    $region8: #{tpu_custom_call.1} parent=1 // pred_region
      %s24 = ssub.s32 8192, 8192
      %25 = vsyncadd [#allocation6], %s24
      %s26 = sshll.u32 [#allocation5], 4
      %s27 = int_to_ptr.vmem [resolvable:$true] %s26
      %32 = dma.hbm_to_vmem [thread:$0]  %s1, 8192, %s27, [#allocation6], 128, 128, 8
    $region9: #{tpu_custom_call.1} parent=1 // pred_fallthru
      _
    // Predicated region
    $region10: #{tpu_custom_call.1} parent=1 // pred_check
      _
    $region11: #{tpu_custom_call.1} parent=1 // pred_check_branch
      %34 = sbr.rel (0) target = $region13
    $region12: #{tpu_custom_call.1} parent=1 // pred_region
      _
    $region13: #{tpu_custom_call.1} parent=1 // pred_fallthru
      _
    // Predicated region
    $region14: #{tpu_custom_call.1} parent=1 // pred_check
      _
    $region15: #{tpu_custom_call.1} parent=1 // pred_check_branch
      %36 = sbr.rel (0) target = $region17
    $region16: #{tpu_custom_call.1} parent=1 // pred_region
      %37 = dma.done [#allocation3], 128
    $region17: #{tpu_custom_call.1} parent=1 // pred_fallthru
      _
    // Predicated region
    $region18: #{tpu_custom_call.1} parent=1 // pred_check
      _
    $region19: #{tpu_custom_call.1} parent=1 // pred_check_branch
      %39 = sbr.rel (0) target = $region21
    $region20: #{tpu_custom_call.1} parent=1 // pred_region
      %40 = dma.done [#allocation6], 8192
    $region21: #{tpu_custom_call.1} parent=1 // pred_fallthru
      _
    %v41 = vld [vmem:[#allocation2] sm:$0xff]
    %v42 = vld [vmem:[%s2] sm:$0xf]
    %v43 = vld [vmem:[#allocation5] sm:$0xff]
    %v44 = vld [vmem:[#allocation5 + $0x8] sm:$0xff]
    %v45 = vld [vmem:[#allocation5 + $0x10] sm:$0xff]
    %v46 = vld [vmem:[#allocation5 + $0x18] sm:$0xff]
    %v47 = vlaneseq
    %v48 = vshrl.u32 %v47, 7
    %v49 = vsub.s32 0, %v48
    %v50 = vrot.slane %v42, %v49
    %vm51 = vcmask 261120
    %v53 = vsel %vm51, %v41, 0
    %55 = vmatprep.subr.mxu0 0.0
    %56 = vmatpush1.msra.mxu0 %v43
    %57 = vmatprep.subr.mxu0 0.0
    %58 = vmatpush1.msra.mxu0 %v44
    %59 = vmatprep.subr.mxu0 0.0
    %60 = vmatpush1.msra.mxu0 %v45
    %61 = vmatprep.subr.mxu0 0.0
    %62 = vmatpush1.msra.mxu0 %v46
    %63 = vmatprep.subr.mxu0 0.0
    %64 = vmatpush1.msra.mxu0 0.0
    %65 = vmatprep.subr.mxu0 0.0
    %66 = vmatpush1.msra.mxu0 0.0
    %67 = vmatprep.subr.mxu0 0.0
    %68 = vmatpush1.msra.mxu0 0.0
    %69 = vmatprep.subr.mxu0 0.0
    %70 = vmatpush1.msra.mxu0 0.0
    %71 = vmatprep.subr.mxu0 0.0
    %72 = vmatpush1.msra.mxu0 0.0
    %73 = vmatprep.subr.mxu0 0.0
    %74 = vmatpush1.msra.mxu0 0.0
    %75 = vmatprep.subr.mxu0 0.0
    %76 = vmatpush1.msra.mxu0 0.0
    %77 = vmatprep.subr.mxu0 0.0
    %78 = vmatpush1.msra.mxu0 0.0
    %79 = vmatprep.subr.mxu0 0.0
    %80 = vmatpush1.msra.mxu0 0.0
    %81 = vmatprep.subr.mxu0 0.0
    %82 = vmatpush1.msra.mxu0 0.0
    %83 = vmatprep.subr.mxu0 0.0
    %84 = vmatpush1.msra.mxu0 0.0
    %85 = vmatprep.subr.mxu0 0.0
    %86 = vmatpush1.msra.mxu0 0.0
    %87 = vmatprep.subr.mxu0 0.0
    %88 = vmatpush1.msra.mxu0 0.0
    %89 = vmatprep.subr.mxu0 0.0
    %90 = vmatpush1.msra.mxu0 0.0
    %91 = vmatprep.subr.mxu0 0.0
    %92 = vmatpush1.msra.mxu0 0.0
    %93 = vmatprep.subr.mxu0 0.0
    %94 = vmatpush1.msra.mxu0 0.0
    %95 = vmatprep.subr.mxu0 0.0
    %96 = vmatpush1.msra.mxu0 0.0
    %97 = vmatprep.subr.mxu0 0.0
    %98 = vmatpush1.msra.mxu0 0.0
    %99 = vmatprep.subr.mxu0 0.0
    %100 = vmatpush1.msra.mxu0 0.0
    %101 = vmatprep.subr.mxu0 0.0
    %102 = vmatpush1.msra.mxu0 0.0
    %103 = vmatprep.subr.mxu0 0.0
    %104 = vmatpush1.msra.mxu0 0.0
    %105 = vmatprep.subr.mxu0 0.0
    %106 = vmatpush1.msra.mxu0 0.0
    %107 = vmatprep.subr.mxu0 0.0
    %108 = vmatpush1.msra.mxu0 0.0
    %109 = vmatprep.subr.mxu0 0.0
    %110 = vmatpush1.msra.mxu0 0.0
    %111 = vmatprep.subr.mxu0 0.0
    %112 = vmatpush1.msra.mxu0 0.0
    %113 = vmatprep.subr.mxu0 0.0
    %114 = vmatpush1.msra.mxu0 0.0
    %115 = vmatprep.subr.mxu0 0.0
    %116 = vmatpush1.msra.mxu0 0.0
    %117 = vmatprep.subr.mxu0 0.0
    %118 = vmatpush1.msra.mxu0 0.0
    %119 = vmatprep.mubr.f32.mxu0 0.0
    %120 = vmatmul.mubr.f32.gmra.mrb[0].mxu0 %v53
    %v121 = vpop.f32.mrb[0].mxu0
    %v122 = vadd.f32 %v50, %v121
    %v123 = vpop.f32.mrb[0].mxu0
    %124 = vdwg.mxu0
    %v125 = vmax.f32 %v122, 0.0
    %s126 = scalar_lea.vmem [#allocation5], 128
    %v127 = vld [vmem:[%s126] sm:$0xff]
    %v128 = vld [vmem:[%s126 + $0x8] sm:$0xff]
    %v129 = vld [vmem:[%s126 + $0x10] sm:$0xff]
    %v130 = vld [vmem:[%s126 + $0x18] sm:$0xff]
    %v131 = vld [vmem:[%s126 + $0x20] sm:$0xff]
    %v132 = vld [vmem:[%s126 + $0x28] sm:$0xff]
    %v133 = vld [vmem:[%s126 + $0x30] sm:$0xff]
    %v134 = vld [vmem:[%s126 + $0x38] sm:$0xff]
    %v135 = vld [vmem:[%s126 + $0x40] sm:$0xff]
    %v136 = vld [vmem:[%s126 + $0x48] sm:$0xff]
    %v137 = vld [vmem:[%s126 + $0x50] sm:$0xff]
    %v138 = vld [vmem:[%s126 + $0x58] sm:$0xff]
    %v139 = vld [vmem:[%s126 + $0x60] sm:$0xff]
    %v140 = vld [vmem:[%s126 + $0x68] sm:$0xff]
    %v141 = vld [vmem:[%s126 + $0x70] sm:$0xff]
    %v142 = vld [vmem:[%s126 + $0x78] sm:$0xff]
    %v143 = vlaneseq
    %v144 = vshrl.u32 %v143, 7
    %v145 = vsub.s32 1, %v144
    %v146 = vrot.slane %v42, %v145
    %147 = vmatprep.subr.mxu0 0.0
    %148 = vmatpush1.msra.mxu0 %v127
    %149 = vmatprep.subr.mxu0 0.0
    %150 = vmatpush1.msra.mxu0 %v128
    %151 = vmatprep.subr.mxu0 0.0
    %152 = vmatpush1.msra.mxu0 %v129
    %153 = vmatprep.subr.mxu0 0.0
    %154 = vmatpush1.msra.mxu0 %v130
    %155 = vmatprep.subr.mxu0 0.0
    %156 = vmatpush1.msra.mxu0 %v131
    %157 = vmatprep.subr.mxu0 0.0
    %158 = vmatpush1.msra.mxu0 %v132
    %159 = vmatprep.subr.mxu0 0.0
    %160 = vmatpush1.msra.mxu0 %v133
    %161 = vmatprep.subr.mxu0 0.0
    %162 = vmatpush1.msra.mxu0 %v134
    %163 = vmatprep.subr.mxu0 0.0
    %164 = vmatpush1.msra.mxu0 %v135
    %165 = vmatprep.subr.mxu0 0.0
    %166 = vmatpush1.msra.mxu0 %v136
    %167 = vmatprep.subr.mxu0 0.0
    %168 = vmatpush1.msra.mxu0 %v137
    %169 = vmatprep.subr.mxu0 0.0
    %170 = vmatpush1.msra.mxu0 %v138
    %171 = vmatprep.subr.mxu0 0.0
    %172 = vmatpush1.msra.mxu0 %v139
    %173 = vmatprep.subr.mxu0 0.0
    %174 = vmatpush1.msra.mxu0 %v140
    %175 = vmatprep.subr.mxu0 0.0
    %176 = vmatpush1.msra.mxu0 %v141
    %177 = vmatprep.subr.mxu0 0.0
    %178 = vmatpush1.msra.mxu0 %v142
    %179 = vmatprep.subr.mxu0 0.0
    %180 = vmatpush1.msra.mxu0 0.0
    %181 = vmatprep.subr.mxu0 0.0
    %182 = vmatpush1.msra.mxu0 0.0
    %183 = vmatprep.subr.mxu0 0.0
    %184 = vmatpush1.msra.mxu0 0.0
    %185 = vmatprep.subr.mxu0 0.0
    %186 = vmatpush1.msra.mxu0 0.0
    %187 = vmatprep.subr.mxu0 0.0
    %188 = vmatpush1.msra.mxu0 0.0
    %189 = vmatprep.subr.mxu0 0.0
    %190 = vmatpush1.msra.mxu0 0.0
    %191 = vmatprep.subr.mxu0 0.0
    %192 = vmatpush1.msra.mxu0 0.0
    %193 = vmatprep.subr.mxu0 0.0
    %194 = vmatpush1.msra.mxu0 0.0
    %195 = vmatprep.subr.mxu0 0.0
    %196 = vmatpush1.msra.mxu0 0.0
    %197 = vmatprep.subr.mxu0 0.0
    %198 = vmatpush1.msra.mxu0 0.0
    %199 = vmatprep.subr.mxu0 0.0
    %200 = vmatpush1.msra.mxu0 0.0
    %201 = vmatprep.subr.mxu0 0.0
    %202 = vmatpush1.msra.mxu0 0.0
    %203 = vmatprep.subr.mxu0 0.0
    %204 = vmatpush1.msra.mxu0 0.0
    %205 = vmatprep.subr.mxu0 0.0
    %206 = vmatpush1.msra.mxu0 0.0
    %207 = vmatprep.subr.mxu0 0.0
    %208 = vmatpush1.msra.mxu0 0.0
    %209 = vmatprep.subr.mxu0 0.0
    %210 = vmatpush1.msra.mxu0 0.0
    %211 = vmatprep.mubr.f32.mxu0 0.0
    %212 = vmatmul.mubr.f32.gmra.mrb[0].mxu0 %v125
    %v213 = vpop.f32.mrb[0].mxu0
    %v214 = vadd.f32 %v146, %v213
    %v215 = vpop.f32.mrb[0].mxu0
    %216 = vdwg.mxu0
    %v217 = vmax.f32 %v214, 0.0
    %s218 = scalar_lea.vmem [#allocation5], 256
    %v219 = vld [vmem:[%s218] sm:$0xff]
    %v220 = vld [vmem:[%s218 + $0x8] sm:$0xff]
    %v221 = vld [vmem:[%s218 + $0x10] sm:$0xff]
    %v222 = vld [vmem:[%s218 + $0x18] sm:$0xff]
    %v223 = vld [vmem:[%s218 + $0x20] sm:$0xff]
    %v224 = vld [vmem:[%s218 + $0x28] sm:$0xff]
    %v225 = vld [vmem:[%s218 + $0x30] sm:$0xff]
    %v226 = vld [vmem:[%s218 + $0x38] sm:$0xff]
    %v227 = vld [vmem:[%s218 + $0x40] sm:$0xff]
    %v228 = vld [vmem:[%s218 + $0x48] sm:$0xff]
    %v229 = vld [vmem:[%s218 + $0x50] sm:$0xff]
    %v230 = vld [vmem:[%s218 + $0x58] sm:$0xff]
    %v231 = vld [vmem:[%s218 + $0x60] sm:$0xff]
    %v232 = vld [vmem:[%s218 + $0x68] sm:$0xff]
    %v233 = vld [vmem:[%s218 + $0x70] sm:$0xff]
    %v234 = vld [vmem:[%s218 + $0x78] sm:$0xff]
    %v235 = vlaneseq
    %v236 = vshrl.u32 %v235, 7
    %v237 = vsub.s32 2, %v236
    %v238 = vrot.slane %v42, %v237
    %239 = vmatprep.subr.mxu0 0.0
    %240 = vmatpush1.msra.mxu0 %v219
    %241 = vmatprep.subr.mxu0 0.0
    %242 = vmatpush1.msra.mxu0 %v220
    %243 = vmatprep.subr.mxu0 0.0
    %244 = vmatpush1.msra.mxu0 %v221
    %245 = vmatprep.subr.mxu0 0.0
    %246 = vmatpush1.msra.mxu0 %v222
    %247 = vmatprep.subr.mxu0 0.0
    %248 = vmatpush1.msra.mxu0 %v223
    %249 = vmatprep.subr.mxu0 0.0
    %250 = vmatpush1.msra.mxu0 %v224
    %251 = vmatprep.subr.mxu0 0.0
    %252 = vmatpush1.msra.mxu0 %v225
    %253 = vmatprep.subr.mxu0 0.0
    %254 = vmatpush1.msra.mxu0 %v226
    %255 = vmatprep.subr.mxu0 0.0
    %256 = vmatpush1.msra.mxu0 %v227
    %257 = vmatprep.subr.mxu0 0.0
    %258 = vmatpush1.msra.mxu0 %v228
    %259 = vmatprep.subr.mxu0 0.0
    %260 = vmatpush1.msra.mxu0 %v229
    %261 = vmatprep.subr.mxu0 0.0
    %262 = vmatpush1.msra.mxu0 %v230
    %263 = vmatprep.subr.mxu0 0.0
    %264 = vmatpush1.msra.mxu0 %v231
    %265 = vmatprep.subr.mxu0 0.0
    %266 = vmatpush1.msra.mxu0 %v232
    %267 = vmatprep.subr.mxu0 0.0
    %268 = vmatpush1.msra.mxu0 %v233
    %269 = vmatprep.subr.mxu0 0.0
    %270 = vmatpush1.msra.mxu0 %v234
    %271 = vmatprep.subr.mxu0 0.0
    %272 = vmatpush1.msra.mxu0 0.0
    %273 = vmatprep.subr.mxu0 0.0
    %274 = vmatpush1.msra.mxu0 0.0
    %275 = vmatprep.subr.mxu0 0.0
    %276 = vmatpush1.msra.mxu0 0.0
    %277 = vmatprep.subr.mxu0 0.0
    %278 = vmatpush1.msra.mxu0 0.0
    %279 = vmatprep.subr.mxu0 0.0
    %280 = vmatpush1.msra.mxu0 0.0
    %281 = vmatprep.subr.mxu0 0.0
    %282 = vmatpush1.msra.mxu0 0.0
    %283 = vmatprep.subr.mxu0 0.0
    %284 = vmatpush1.msra.mxu0 0.0
    %285 = vmatprep.subr.mxu0 0.0
    %286 = vmatpush1.msra.mxu0 0.0
    %287 = vmatprep.subr.mxu0 0.0
    %288 = vmatpush1.msra.mxu0 0.0
    %289 = vmatprep.subr.mxu0 0.0
    %290 = vmatpush1.msra.mxu0 0.0
    %291 = vmatprep.subr.mxu0 0.0
    %292 = vmatpush1.msra.mxu0 0.0
    %293 = vmatprep.subr.mxu0 0.0
    %294 = vmatpush1.msra.mxu0 0.0
    %295 = vmatprep.subr.mxu0 0.0
    %296 = vmatpush1.msra.mxu0 0.0
    %297 = vmatprep.subr.mxu0 0.0
    %298 = vmatpush1.msra.mxu0 0.0
    %299 = vmatprep.subr.mxu0 0.0
    %300 = vmatpush1.msra.mxu0 0.0
    %301 = vmatprep.subr.mxu0 0.0
    %302 = vmatpush1.msra.mxu0 0.0
    %303 = vmatprep.mubr.f32.mxu0 0.0
    %304 = vmatmul.mubr.f32.gmra.mrb[0].mxu0 %v217
    %v305 = vpop.f32.mrb[0].mxu0
    %v306 = vadd.f32 %v238, %v305
    %v307 = vpop.f32.mrb[0].mxu0
    %308 = vdwg.mxu0
    %v309 = vmax.f32 %v306, 0.0
    %s310 = scalar_lea.vmem [#allocation5], 384
    %v311 = vld [vmem:[%s310] sm:$0xff]
    %v312 = vld [vmem:[%s310 + $0x8] sm:$0xff]
    %v313 = vld [vmem:[%s310 + $0x10] sm:$0xff]
    %v314 = vld [vmem:[%s310 + $0x18] sm:$0xff]
    %v315 = vld [vmem:[%s310 + $0x20] sm:$0xff]
    %v316 = vld [vmem:[%s310 + $0x28] sm:$0xff]
    %v317 = vld [vmem:[%s310 + $0x30] sm:$0xff]
    %v318 = vld [vmem:[%s310 + $0x38] sm:$0xff]
    %v319 = vld [vmem:[%s310 + $0x40] sm:$0xff]
    %v320 = vld [vmem:[%s310 + $0x48] sm:$0xff]
    %v321 = vld [vmem:[%s310 + $0x50] sm:$0xff]
    %v322 = vld [vmem:[%s310 + $0x58] sm:$0xff]
    %v323 = vld [vmem:[%s310 + $0x60] sm:$0xff]
    %v324 = vld [vmem:[%s310 + $0x68] sm:$0xff]
    %v325 = vld [vmem:[%s310 + $0x70] sm:$0xff]
    %v326 = vld [vmem:[%s310 + $0x78] sm:$0xff]
    %v327 = vlaneseq
    %v328 = vshrl.u32 %v327, 7
    %v329 = vsub.s32 3, %v328
    %v330 = vrot.slane %v42, %v329
    %331 = vmatprep.subr.mxu0 0.0
    %332 = vmatpush1.msra.mxu0 %v311
    %333 = vmatprep.subr.mxu0 0.0
    %334 = vmatpush1.msra.mxu0 %v312
    %335 = vmatprep.subr.mxu0 0.0
    %336 = vmatpush1.msra.mxu0 %v313
    %337 = vmatprep.subr.mxu0 0.0
    %338 = vmatpush1.msra.mxu0 %v314
    %339 = vmatprep.subr.mxu0 0.0
    %340 = vmatpush1.msra.mxu0 %v315
    %341 = vmatprep.subr.mxu0 0.0
    %342 = vmatpush1.msra.mxu0 %v316
    %343 = vmatprep.subr.mxu0 0.0
    %344 = vmatpush1.msra.mxu0 %v317
    %345 = vmatprep.subr.mxu0 0.0
    %346 = vmatpush1.msra.mxu0 %v318
    %347 = vmatprep.subr.mxu0 0.0
    %348 = vmatpush1.msra.mxu0 %v319
    %349 = vmatprep.subr.mxu0 0.0
    %350 = vmatpush1.msra.mxu0 %v320
    %351 = vmatprep.subr.mxu0 0.0
    %352 = vmatpush1.msra.mxu0 %v321
    %353 = vmatprep.subr.mxu0 0.0
    %354 = vmatpush1.msra.mxu0 %v322
    %355 = vmatprep.subr.mxu0 0.0
    %356 = vmatpush1.msra.mxu0 %v323
    %357 = vmatprep.subr.mxu0 0.0
    %358 = vmatpush1.msra.mxu0 %v324
    %359 = vmatprep.subr.mxu0 0.0
    %360 = vmatpush1.msra.mxu0 %v325
    %361 = vmatprep.subr.mxu0 0.0
    %362 = vmatpush1.msra.mxu0 %v326
    %363 = vmatprep.subr.mxu0 0.0
    %364 = vmatpush1.msra.mxu0 0.0
    %365 = vmatprep.subr.mxu0 0.0
    %366 = vmatpush1.msra.mxu0 0.0
    %367 = vmatprep.subr.mxu0 0.0
    %368 = vmatpush1.msra.mxu0 0.0
    %369 = vmatprep.subr.mxu0 0.0
    %370 = vmatpush1.msra.mxu0 0.0
    %371 = vmatprep.subr.mxu0 0.0
    %372 = vmatpush1.msra.mxu0 0.0
    %373 = vmatprep.subr.mxu0 0.0
    %374 = vmatpush1.msra.mxu0 0.0
    %375 = vmatprep.subr.mxu0 0.0
    %376 = vmatpush1.msra.mxu0 0.0
    %377 = vmatprep.subr.mxu0 0.0
    %378 = vmatpush1.msra.mxu0 0.0
    %379 = vmatprep.subr.mxu0 0.0
    %380 = vmatpush1.msra.mxu0 0.0
    %381 = vmatprep.subr.mxu0 0.0
    %382 = vmatpush1.msra.mxu0 0.0
    %383 = vmatprep.subr.mxu0 0.0
    %384 = vmatpush1.msra.mxu0 0.0
    %385 = vmatprep.subr.mxu0 0.0
    %386 = vmatpush1.msra.mxu0 0.0
    %387 = vmatprep.subr.mxu0 0.0
    %388 = vmatpush1.msra.mxu0 0.0
    %389 = vmatprep.subr.mxu0 0.0
    %390 = vmatpush1.msra.mxu0 0.0
    %391 = vmatprep.subr.mxu0 0.0
    %392 = vmatpush1.msra.mxu0 0.0
    %393 = vmatprep.subr.mxu0 0.0
    %394 = vmatpush1.msra.mxu0 0.0
    %395 = vmatprep.mubr.f32.mxu0 0.0
    %396 = vmatmul.mubr.f32.gmra.mrb[0].mxu0 %v309
    %v397 = vpop.f32.mrb[0].mxu0
    %v398 = vadd.f32 %v330, %v397
    %v399 = vpop.f32.mrb[0].mxu0
    %400 = vdwg.mxu0
    %401 = vst.msk [vmem:[#allocation7] sm:$0xff] %vm51, %v398
    // Predicated region
    $region22: #{tpu_custom_call.1} parent=1 // pred_check
      _
    $region23: #{tpu_custom_call.1} parent=1 // pred_check_branch
      %403 = sbr.rel (0) target = $region25
    $region24: #{tpu_custom_call.1} parent=1 // pred_region
      %s405 = ssub.s32 128, 128
      %406 = vsyncadd [#allocation4], %s405
      %s408 = sshll.u32 [#allocation7], 4
      %s409 = int_to_ptr.vmem [resolvable:$true] %s408
      %411 = dma.vmem_to_hbm [thread:$0]  %s409, 128, %s3, [#allocation4]
    $region25: #{tpu_custom_call.1} parent=1 // pred_fallthru
      _
    // Predicated region
    $region26: #{tpu_custom_call.1} parent=1 // pred_check
      _
    $region27: #{tpu_custom_call.1} parent=1 // pred_check_branch
      %413 = sbr.rel (0) target = $region29
    $region28: #{tpu_custom_call.1} parent=1 // pred_region
      %414 = dma.done [#allocation4], 128
    $region29: #{tpu_custom_call.1} parent=1 // pred_fallthru
      _
    %415 = vsyncpa [#allocation3], 1
    %416 = vsyncpa [#allocation6], 1
    %417 = vsyncpa [#allocation4], 1

</llo_original>
